<compile_context>
chip_gen: v6e
topology: v6e:2x2x1
jax: 0.10.0
libtpu: 0.0.40
codegen_flags: <defaults>
</compile_context>

<pallas_src>
import functools

import jax
import jax.numpy as jnp
from jax.experimental import pallas as pl
from jax.experimental.pallas import tpu as pltpu


def _conv_gn_mish_kernel(x_ref, w_ref, b_ref, gamma_ref, beta_ref, grp_ref, grpt_ref,
                         o_ref, *, block_b, t_out, c_in, c_out, k_size, inv_count, eps):
    """Per-grid-step: Bblk batch elements of Conv1d + GroupNorm + Mish.

    x_ref:     (Bblk, T+2*pad, C_in)  channel-last, time-padded input block (bf16)
    w_ref:     (K, C_in, C_out)       conv weight, tap-major (bf16)
    b_ref:     (1, C_out)             conv bias (f32)
    gamma_ref: (1, C_out)             GroupNorm weight (f32)
    beta_ref:  (1, C_out)             GroupNorm bias (f32)
    grp_ref:   (G, C_out)             one-hot group membership (f32)
    grpt_ref:  (C_out, G)             its transpose (f32)
    o_ref:     (Bblk, T, C_out)       output block, lane-dense for C_out >= 128
    """
    rows = block_b * t_out

    # ---- Conv1d: K accumulating bf16 MXU matmuls with f32 accumulation.  Each tap is
    # a direct offset read of the padded input block (halo zeros already present), so
    # no scratch staging and no in-kernel masking/rolling is needed.
    tap0 = x_ref[:, 0:t_out, :].reshape(rows, c_in)
    acc = jnp.dot(tap0, w_ref[0], preferred_element_type=jnp.float32)      # (rows, C_out)
    for k in range(1, k_size):                     # K is small & static -> unrolled
        tap = x_ref[:, k:k + t_out, :].reshape(rows, c_in)
        acc = acc + jnp.dot(tap, w_ref[k], preferred_element_type=jnp.float32)
    acc3 = acc.reshape(block_b, t_out, c_out)      # (Bblk, T, C_out), C_out on lanes
    # NOTE: the conv bias is NOT added here; it is folded into the GN scale/offset
    # below so the full tile never pays an extra per-element add.

    # ---- GroupNorm stats: single pass over acc3 (sum and sum of squares), then tiny
    # per-(batch, group) math via one-hot matmuls; conv bias folded analytically.
    bias = b_ref[...]                                              # (1, C_out)
    s1 = jnp.sum(acc3, axis=1)                                     # (Bblk, C_out) sum_t a
    s2 = jnp.sum(acc3 * acc3, axis=1)                              # (Bblk, C_out) sum_t a^2
    s1b = s1 + t_out * bias                                        # sum_t (a + bias)
    s2b = s2 + 2.0 * bias * s1 + t_out * (bias * bias)             # sum_t (a + bias)^2
    g1 = jnp.dot(s1b, grpt_ref[...], preferred_element_type=jnp.float32)   # (Bblk, G)
    g2 = jnp.dot(s2b, grpt_ref[...], preferred_element_type=jnp.float32)   # (Bblk, G)
    mean_g = g1 * inv_count
    var_g = jnp.maximum(g2 * inv_count - mean_g * mean_g, 0.0)     # one-pass, clamped
    inv_std_g = jax.lax.rsqrt(var_g + eps)                         # (Bblk, G)
    mean_c = jnp.dot(mean_g, grp_ref[...], preferred_element_type=jnp.float32)   # (Bblk, C_out)
    istd_c = jnp.dot(inv_std_g, grp_ref[...], preferred_element_type=jnp.float32)

    # ---- Fused affine: y = ((a + bias) - mean) * istd * gamma + beta = a*A + Bc ----
    A = istd_c * gamma_ref[...]                                    # (Bblk, C_out)
    Bc = beta_ref[...] + (bias - mean_c) * A                       # (Bblk, C_out)
    y = acc3 * A[:, None, :] + Bc[:, None, :]                      # 2 VPU ops / element

    # ---- Mish: y * tanh(softplus(y)) == y * (n-1)/(n+1), n = (1+e^y)^2 ----
    e = jnp.exp(jnp.minimum(y, 25.0))          # clamp: for y > 25 the ratio is 1.0 in f32
    n = (1.0 + e) * (1.0 + e)
    out = y * ((n - 1.0) * pl.reciprocal(n + 1.0, approx=True))

    o_ref[...] = out.astype(o_ref.dtype)


def diffusion_conv1d_block(x, weight, bias, gamma, beta, *, n_groups, eps=1e-5,
                           block_b=None, compute_dtype=jnp.bfloat16,
                           out_dtype=jnp.float32,
                           x_channels_last=False, out_channels_last=False):
    """Fused Conv1d(pad=K//2) -> GroupNorm -> Mish.

    Default I/O matches torch: x (B, C_in, T) -> (B, C_out, T) float32.
    Set x_channels_last / out_channels_last=True to skip the wrapper transposes when
    the surrounding model keeps an NLC (B, T, C) layout (removes two full HBM passes
    around this memory-bound kernel).  Set out_dtype=jnp.bfloat16 to halve writeback
    if the consumer tolerates it.
    """
    if x_channels_last:
        B, T, C_in = x.shape
    else:
        B, C_in, T = x.shape
    C_out, C_in_w, K = weight.shape
    assert C_in_w == C_in
    assert K % 2 == 1, "padding=K//2 keeps length only for odd K"
    assert C_out % n_groups == 0
    pad = K // 2
    T_pad = T + 2 * pad
    cg = C_out // n_groups

    in_bytes = jnp.dtype(compute_dtype).itemsize
    out_bytes = jnp.dtype(out_dtype).itemsize

    # ---- Grid / VMEM sizing (shape-derived; conservative so it also fits v7x's 64 MiB).
    per_b = (2 * T_pad * C_in * in_bytes        # input block, double buffered
             + 2 * T * C_out * out_bytes        # output block, double buffered
             + 4 * T * C_out * 4)               # f32 in-kernel temporaries (acc3 / y / mish)
    fixed = K * C_in * C_out * in_bytes + 16 * C_out * 4   # weights + per-channel params
    budget = 24 * 1024 * 1024
    if block_b is None:
        max_bb = max(1, (budget - fixed) // max(per_b, 1))
        # cdiv(B, 2): guarantee >= 2 grid steps when B >= 2 so both v7x TCs get work,
        # while still giving large B big blocks (amortizes ~0.35us/step on v5e/v6e).
        block_b = int(max(1, min(max_bb, pl.cdiv(B, 2))))
    nb = pl.cdiv(B, block_b)
    B_pad = nb * block_b
    est = fixed + block_b * per_b
    vmem_limit = int(min(56 * 1024 * 1024, max(32 * 1024 * 1024, 2 * est)))

    # ---- One fused XLA pass over x: (transpose to NLC) + bf16 cast + batch/time pad.
    # The time pad provides the conv halo zeros so the kernel needs no shifts/masks.
    x_nlc = x if x_channels_last else jnp.transpose(x, (0, 2, 1))          # (B, T, C_in)
    x_p = jnp.pad(x_nlc.astype(compute_dtype),
                  ((0, B_pad - B), (pad, pad), (0, 0)))                    # (B_pad, T_pad, C_in)

    # Conv weight, tap-major: w[k, ci, co] = weight[co, ci, k].
    w_t = jnp.transpose(weight, (2, 1, 0)).astype(compute_dtype)           # (K, C_in, C_out)

    b2 = bias.astype(jnp.float32).reshape(1, C_out)
    gamma2 = gamma.astype(jnp.float32).reshape(1, C_out)
    beta2 = beta.astype(jnp.float32).reshape(1, C_out)

    # One-hot group membership (G, C_out) + transpose: per-group reduce / broadcast-back
    # as tiny MXU matmuls (robust, avoids lane-splitting reshapes).
    grp = (jnp.arange(C_out)[None, :] // cg == jnp.arange(n_groups)[:, None]).astype(jnp.float32)
    grp_t = grp.T

    kernel = functools.partial(
        _conv_gn_mish_kernel,
        block_b=block_b, t_out=T, c_in=C_in, c_out=C_out, k_size=K,
        inv_count=1.0 / float(cg * T), eps=float(eps),
    )

    out = pl.pallas_call(
        kernel,
        out_shape=jax.ShapeDtypeStruct((B_pad, T, C_out), out_dtype),
        grid=(nb,),
        in_specs=[
            pl.BlockSpec((block_b, T_pad, C_in), lambda b: (b, 0, 0)),   # padded input block
            pl.BlockSpec((K, C_in, C_out), lambda b: (0, 0, 0)),         # conv weight (tap-major)
            pl.BlockSpec((1, C_out), lambda b: (0, 0)),                  # conv bias
            pl.BlockSpec((1, C_out), lambda b: (0, 0)),                  # GN gamma
            pl.BlockSpec((1, C_out), lambda b: (0, 0)),                  # GN beta
            pl.BlockSpec((n_groups, C_out), lambda b: (0, 0)),           # group one-hot
            pl.BlockSpec((C_out, n_groups), lambda b: (0, 0)),           # its transpose
        ],
        out_specs=pl.BlockSpec((block_b, T, C_out), lambda b: (b, 0, 0)),  # C_out on lanes
        compiler_params=pltpu.CompilerParams(
            dimension_semantics=("parallel",),
            vmem_limit_bytes=vmem_limit,
        ),
    )(x_p, w_t, b2, gamma2, beta2, grp, grp_t)

    out = out[:B]                                   # drop batch padding, if any
    if out_channels_last:
        return out                                  # (B, T, C_out) — no extra HBM pass
    return jnp.transpose(out, (0, 2, 1))            # torch NCL (B, C_out, T)


def _reference(x, weight, bias, gamma, beta, *, n_groups, eps=1e-5):
    """Pure-JAX f32 reference mirroring torch Conv1d + GroupNorm + Mish."""
    K = weight.shape[-1]
    pad = K // 2
    y = jax.lax.conv_general_dilated(
        x, weight, window_strides=(1,), padding=[(pad, pad)],
        dimension_numbers=("NCH", "OIH", "NCH"),
        precision=jax.lax.Precision.HIGHEST)
    y = y + bias[None, :, None]
    B, C, T = y.shape
    yg = y.reshape(B, n_groups, C // n_groups, T)
    mean = yg.mean(axis=(2, 3), keepdims=True)
    var = ((yg - mean) ** 2).mean(axis=(2, 3), keepdims=True)
    yn = ((yg - mean) / jnp.sqrt(var + eps)).reshape(B, C, T)
    yn = yn * gamma[None, :, None] + beta[None, :, None]
    return yn * jnp.tanh(jnp.log1p(jnp.exp(yn)))


if __name__ == "__main__":
    # Small shapes consistent with the module: Conv1d(C_in=8 -> C_out=16, k=3), n_groups=8.
    B, C_in, C_out, K, T, N_GROUPS = 2, 8, 16, 3, 16, 8

    key = jax.random.PRNGKey(0)
    kx, kw, kb, kg, kbt = jax.random.split(key, 5)
    x = jax.random.normal(kx, (B, C_in, T), dtype=jnp.float32)
    # Deterministic synthetic parameters (PyTorch-style uniform fan-in init for conv).
    fan_in = C_in * K
    bound = 1.0 / (fan_in ** 0.5)
    weight = jax.random.uniform(kw, (C_out, C_in, K), jnp.float32, -bound, bound)
    bias = jax.random.uniform(kb, (C_out,), jnp.float32, -bound, bound)
    gamma = 1.0 + 0.1 * jax.random.normal(kg, (C_out,), dtype=jnp.float32)
    beta = 0.1 * jax.random.normal(kbt, (C_out,), dtype=jnp.float32)

    out = diffusion_conv1d_block(x, weight, bias, gamma, beta, n_groups=N_GROUPS)
    out = jax.block_until_ready(out)

    ref = _reference(x, weight, bias, gamma, beta, n_groups=N_GROUPS)
    assert out.shape == (B, C_out, T)
    # Tolerance covers bf16 conv operands + approx reciprocal vs. the full-f32 reference.
    assert jnp.allclose(out, ref, atol=4e-2, rtol=4e-2), "Pallas output mismatch vs reference"

    print("KERNEL_OK")
</pallas_src>

<mosaic_0001>
module attributes {stable_mosaic.version = 11 : i64} {
  func.func @_conv_gn_mish_kernel(%arg0: i32, %arg1: memref<1x18x8xbf16, #tpu.memory_space<vmem>>, %arg2: memref<3x8x16xbf16, #tpu.memory_space<vmem>>, %arg3: memref<1x16xf32, #tpu.memory_space<vmem>>, %arg4: memref<1x16xf32, #tpu.memory_space<vmem>>, %arg5: memref<1x16xf32, #tpu.memory_space<vmem>>, %arg6: memref<8x16xf32, #tpu.memory_space<vmem>>, %arg7: memref<16x8xf32, #tpu.memory_space<vmem>>, %arg8: memref<1x16x16xf32, #tpu.memory_space<vmem>>) attributes {dimension_semantics = [#tpu.dimension_semantics<parallel>], iteration_bounds = array<i64: 2>, scalar_prefetch = 0 : i64, scratch_operands = 0 : i64, tpu.core_type = #tpu.core_type<tc>, window_params = [{transform_indices = @transform_0, window_bounds = array<i64: 1, 18, 8>}, {pipeline_mode = #tpu.pipeline_mode<synchronous>, transform_indices = @transform_1, window_bounds = array<i64: 3, 8, 16>}, {pipeline_mode = #tpu.pipeline_mode<synchronous>, transform_indices = @transform_2, window_bounds = array<i64: 1, 16>}, {pipeline_mode = #tpu.pipeline_mode<synchronous>, transform_indices = @transform_3, window_bounds = array<i64: 1, 16>}, {pipeline_mode = #tpu.pipeline_mode<synchronous>, transform_indices = @transform_4, window_bounds = array<i64: 1, 16>}, {pipeline_mode = #tpu.pipeline_mode<synchronous>, transform_indices = @transform_5, window_bounds = array<i64: 8, 16>}, {pipeline_mode = #tpu.pipeline_mode<synchronous>, transform_indices = @transform_6, window_bounds = array<i64: 16, 8>}, {transform_indices = @transform_7, window_bounds = array<i64: 1, 16, 16>}]} {
    %c0 = arith.constant 0 : index
    %c0_0 = arith.constant 0 : index
    %c0_1 = arith.constant 0 : index
    %0 = vector.load %arg1[%c0, %c0_0, %c0_1] : memref<1x18x8xbf16, #tpu.memory_space<vmem>>, vector<1x16x8xbf16>
    %1 = vector.shape_cast %0 : vector<1x16x8xbf16> to vector<16x8xbf16>
    %c0_2 = arith.constant 0 : index
    %c0_3 = arith.constant 0 : index
    %c0_4 = arith.constant 0 : index
    %2 = vector.load %arg2[%c0_2, %c0_3, %c0_4] : memref<3x8x16xbf16, #tpu.memory_space<vmem>>, vector<1x8x16xbf16>
    %3 = vector.shape_cast %2 : vector<1x8x16xbf16> to vector<8x16xbf16>
    %cst = arith.constant dense<0.000000e+00> : vector<16x16xf32>
    %4 = tpu.matmul %1, %3, %cst {dimension_numbers = #tpu.dot_dimension_numbers<[1], [0], [0], [1], [0, 0, 1, 1], [], []>} : vector<16x8xbf16>, vector<8x16xbf16>, vector<16x16xf32> -> vector<16x16xf32>
    %c0_5 = arith.constant 0 : index
    %c1 = arith.constant 1 : index
    %c0_6 = arith.constant 0 : index
    %5 = vector.load %arg1[%c0_5, %c1, %c0_6] : memref<1x18x8xbf16, #tpu.memory_space<vmem>>, vector<1x16x8xbf16>
    %6 = vector.shape_cast %5 : vector<1x16x8xbf16> to vector<16x8xbf16>
    %c1_7 = arith.constant 1 : index
    %c0_8 = arith.constant 0 : index
    %c0_9 = arith.constant 0 : index
    %7 = vector.load %arg2[%c1_7, %c0_8, %c0_9] : memref<3x8x16xbf16, #tpu.memory_space<vmem>>, vector<1x8x16xbf16>
    %8 = vector.shape_cast %7 : vector<1x8x16xbf16> to vector<8x16xbf16>
    %cst_10 = arith.constant dense<0.000000e+00> : vector<16x16xf32>
    %9 = tpu.matmul %6, %8, %cst_10 {dimension_numbers = #tpu.dot_dimension_numbers<[1], [0], [0], [1], [0, 0, 1, 1], [], []>} : vector<16x8xbf16>, vector<8x16xbf16>, vector<16x16xf32> -> vector<16x16xf32>
    %10 = arith.addf %4, %9 : vector<16x16xf32>
    %c0_11 = arith.constant 0 : index
    %c2 = arith.constant 2 : index
    %c0_12 = arith.constant 0 : index
    %11 = vector.load %arg1[%c0_11, %c2, %c0_12] : memref<1x18x8xbf16, #tpu.memory_space<vmem>>, vector<1x16x8xbf16>
    %12 = vector.shape_cast %11 : vector<1x16x8xbf16> to vector<16x8xbf16>
    %c2_13 = arith.constant 2 : index
    %c0_14 = arith.constant 0 : index
    %c0_15 = arith.constant 0 : index
    %13 = vector.load %arg2[%c2_13, %c0_14, %c0_15] : memref<3x8x16xbf16, #tpu.memory_space<vmem>>, vector<1x8x16xbf16>
    %14 = vector.shape_cast %13 : vector<1x8x16xbf16> to vector<8x16xbf16>
    %cst_16 = arith.constant dense<0.000000e+00> : vector<16x16xf32>
    %15 = tpu.matmul %12, %14, %cst_16 {dimension_numbers = #tpu.dot_dimension_numbers<[1], [0], [0], [1], [0, 0, 1, 1], [], []>} : vector<16x8xbf16>, vector<8x16xbf16>, vector<16x16xf32> -> vector<16x16xf32>
    %16 = arith.addf %10, %15 : vector<16x16xf32>
    %17 = vector.shape_cast %16 : vector<16x16xf32> to vector<1x16x16xf32>
    %c0_17 = arith.constant 0 : index
    %c0_18 = arith.constant 0 : index
    %18 = vector.load %arg3[%c0_17, %c0_18] : memref<1x16xf32, #tpu.memory_space<vmem>>, vector<1x16xf32>
    %cst_19 = arith.constant dense<0.000000e+00> : vector<1x16xf32>
    %19 = vector.multi_reduction <add>, %17, %cst_19 [1] : vector<1x16x16xf32> to vector<1x16xf32>
    %20 = arith.mulf %17, %17 : vector<1x16x16xf32>
    %cst_20 = arith.constant dense<0.000000e+00> : vector<1x16xf32>
    %21 = vector.multi_reduction <add>, %20, %cst_20 [1] : vector<1x16x16xf32> to vector<1x16xf32>
    %cst_21 = arith.constant 1.600000e+01 : f32
    %22 = vector.broadcast %cst_21 : f32 to vector<1x16xf32>
    %23 = arith.mulf %22, %18 : vector<1x16xf32>
    %24 = arith.addf %19, %23 : vector<1x16xf32>
    %cst_22 = arith.constant 2.000000e+00 : f32
    %25 = vector.broadcast %cst_22 : f32 to vector<1x16xf32>
    %26 = arith.mulf %25, %18 : vector<1x16xf32>
    %27 = arith.mulf %26, %19 : vector<1x16xf32>
    %28 = arith.addf %21, %27 : vector<1x16xf32>
    %29 = arith.mulf %18, %18 : vector<1x16xf32>
    %cst_23 = arith.constant 1.600000e+01 : f32
    %30 = vector.broadcast %cst_23 : f32 to vector<1x16xf32>
    %31 = arith.mulf %30, %29 : vector<1x16xf32>
    %32 = arith.addf %28, %31 : vector<1x16xf32>
    %c0_24 = arith.constant 0 : index
    %c0_25 = arith.constant 0 : index
    %33 = vector.load %arg7[%c0_24, %c0_25] : memref<16x8xf32, #tpu.memory_space<vmem>>, vector<16x8xf32>
    %cst_26 = arith.constant dense<0.000000e+00> : vector<1x8xf32>
    %34 = tpu.matmul %24, %33, %cst_26 {dimension_numbers = #tpu.dot_dimension_numbers<[1], [0], [0], [1], [0, 0, 1, 1], [], []>} : vector<1x16xf32>, vector<16x8xf32>, vector<1x8xf32> -> vector<1x8xf32>
    %c0_27 = arith.constant 0 : index
    %c0_28 = arith.constant 0 : index
    %35 = vector.load %arg7[%c0_27, %c0_28] : memref<16x8xf32, #tpu.memory_space<vmem>>, vector<16x8xf32>
    %cst_29 = arith.constant dense<0.000000e+00> : vector<1x8xf32>
    %36 = tpu.matmul %32, %35, %cst_29 {dimension_numbers = #tpu.dot_dimension_numbers<[1], [0], [0], [1], [0, 0, 1, 1], [], []>} : vector<1x16xf32>, vector<16x8xf32>, vector<1x8xf32> -> vector<1x8xf32>
    %cst_30 = arith.constant 3.125000e-02 : f32
    %37 = vector.broadcast %cst_30 : f32 to vector<1x8xf32>
    %38 = arith.mulf %34, %37 : vector<1x8xf32>
    %cst_31 = arith.constant 3.125000e-02 : f32
    %39 = vector.broadcast %cst_31 : f32 to vector<1x8xf32>
    %40 = arith.mulf %36, %39 : vector<1x8xf32>
    %41 = arith.mulf %38, %38 : vector<1x8xf32>
    %42 = arith.subf %40, %41 : vector<1x8xf32>
    %cst_32 = arith.constant 0.000000e+00 : f32
    %43 = vector.broadcast %cst_32 : f32 to vector<1x8xf32>
    %44 = arith.maximumf %42, %43 : vector<1x8xf32>
    %cst_33 = arith.constant 9.99999974E-6 : f32
    %45 = vector.broadcast %cst_33 : f32 to vector<1x8xf32>
    %46 = arith.addf %44, %45 : vector<1x8xf32>
    %47 = math.rsqrt %46 : vector<1x8xf32>
    %c0_34 = arith.constant 0 : index
    %c0_35 = arith.constant 0 : index
    %48 = vector.load %arg6[%c0_34, %c0_35] : memref<8x16xf32, #tpu.memory_space<vmem>>, vector<8x16xf32>
    %cst_36 = arith.constant dense<0.000000e+00> : vector<1x16xf32>
    %49 = tpu.matmul %38, %48, %cst_36 {dimension_numbers = #tpu.dot_dimension_numbers<[1], [0], [0], [1], [0, 0, 1, 1], [], []>} : vector<1x8xf32>, vector<8x16xf32>, vector<1x16xf32> -> vector<1x16xf32>
    %c0_37 = arith.constant 0 : index
    %c0_38 = arith.constant 0 : index
    %50 = vector.load %arg6[%c0_37, %c0_38] : memref<8x16xf32, #tpu.memory_space<vmem>>, vector<8x16xf32>
    %cst_39 = arith.constant dense<0.000000e+00> : vector<1x16xf32>
    %51 = tpu.matmul %47, %50, %cst_39 {dimension_numbers = #tpu.dot_dimension_numbers<[1], [0], [0], [1], [0, 0, 1, 1], [], []>} : vector<1x8xf32>, vector<8x16xf32>, vector<1x16xf32> -> vector<1x16xf32>
    %c0_40 = arith.constant 0 : index
    %c0_41 = arith.constant 0 : index
    %52 = vector.load %arg4[%c0_40, %c0_41] : memref<1x16xf32, #tpu.memory_space<vmem>>, vector<1x16xf32>
    %53 = arith.mulf %51, %52 : vector<1x16xf32>
    %c0_42 = arith.constant 0 : index
    %c0_43 = arith.constant 0 : index
    %54 = vector.load %arg5[%c0_42, %c0_43] : memref<1x16xf32, #tpu.memory_space<vmem>>, vector<1x16xf32>
    %55 = arith.subf %18, %49 : vector<1x16xf32>
    %56 = arith.mulf %55, %53 : vector<1x16xf32>
    %57 = arith.addf %54, %56 : vector<1x16xf32>
    %58 = vector.shape_cast %53 : vector<1x16xf32> to vector<1x1x16xf32>
    %59 = vector.broadcast %58 : vector<1x1x16xf32> to vector<1x16x16xf32>
    %60 = arith.mulf %17, %59 : vector<1x16x16xf32>
    %61 = vector.shape_cast %57 : vector<1x16xf32> to vector<1x1x16xf32>
    %62 = vector.broadcast %61 : vector<1x1x16xf32> to vector<1x16x16xf32>
    %63 = arith.addf %60, %62 : vector<1x16x16xf32>
    %cst_44 = arith.constant 2.500000e+01 : f32
    %64 = vector.broadcast %cst_44 : f32 to vector<1x16x16xf32>
    %65 = arith.minimumf %63, %64 : vector<1x16x16xf32>
    %66 = math.exp %65 : vector<1x16x16xf32>
    %cst_45 = arith.constant 1.000000e+00 : f32
    %67 = vector.broadcast %cst_45 : f32 to vector<1x16x16xf32>
    %68 = arith.addf %67, %66 : vector<1x16x16xf32>
    %cst_46 = arith.constant 1.000000e+00 : f32
    %69 = vector.broadcast %cst_46 : f32 to vector<1x16x16xf32>
    %70 = arith.addf %69, %66 : vector<1x16x16xf32>
    %71 = arith.mulf %68, %70 : vector<1x16x16xf32>
    %cst_47 = arith.constant 1.000000e+00 : f32
    %72 = vector.broadcast %cst_47 : f32 to vector<1x16x16xf32>
    %73 = arith.subf %71, %72 : vector<1x16x16xf32>
    %cst_48 = arith.constant 1.000000e+00 : f32
    %74 = vector.broadcast %cst_48 : f32 to vector<1x16x16xf32>
    %75 = arith.addf %71, %74 : vector<1x16x16xf32>
    %76 = tpu.reciprocal %75 {approx = true} : vector<1x16x16xf32> -> vector<1x16x16xf32>
    %77 = arith.mulf %73, %76 : vector<1x16x16xf32>
    %78 = arith.mulf %63, %77 : vector<1x16x16xf32>
    %c0_49 = arith.constant 0 : index
    %c0_50 = arith.constant 0 : index
    %c0_51 = arith.constant 0 : index
    %79 = vector.load %arg8[%c0_49, %c0_50, %c0_51] : memref<1x16x16xf32, #tpu.memory_space<vmem>>, vector<1x16x16xf32>
    tpu.vector_store %arg8[%c0_49, %c0_50, %c0_51], %78 {strides = array<i32>} : memref<1x16x16xf32, #tpu.memory_space<vmem>>, vector<1x16x16xf32>,
    return
  }
  func.func @transform_0(%arg0: i32) -> (i32, i32, i32) {
    %c0_i32 = arith.constant 0 : i32
    %c0_i32_0 = arith.constant 0 : i32
    %c0_i32_1 = arith.constant 0 : i32
    return %arg0, %c0_i32, %c0_i32_0 : i32, i32, i32
  }
  func.func @transform_1(%arg0: i32) -> (i32, i32, i32) {
    %c0_i32 = arith.constant 0 : i32
    %c0_i32_0 = arith.constant 0 : i32
    %c0_i32_1 = arith.constant 0 : i32
    %c0_i32_2 = arith.constant 0 : i32
    return %c0_i32, %c0_i32_0, %c0_i32_1 : i32, i32, i32
  }
  func.func @transform_2(%arg0: i32) -> (i32, i32) {
    %c0_i32 = arith.constant 0 : i32
    %c0_i32_0 = arith.constant 0 : i32
    %c0_i32_1 = arith.constant 0 : i32
    return %c0_i32, %c0_i32_0 : i32, i32
  }
  func.func @transform_3(%arg0: i32) -> (i32, i32) {
    %c0_i32 = arith.constant 0 : i32
    %c0_i32_0 = arith.constant 0 : i32
    %c0_i32_1 = arith.constant 0 : i32
    return %c0_i32, %c0_i32_0 : i32, i32
  }
  func.func @transform_4(%arg0: i32) -> (i32, i32) {
    %c0_i32 = arith.constant 0 : i32
    %c0_i32_0 = arith.constant 0 : i32
    %c0_i32_1 = arith.constant 0 : i32
    return %c0_i32, %c0_i32_0 : i32, i32
  }
  func.func @transform_5(%arg0: i32) -> (i32, i32) {
    %c0_i32 = arith.constant 0 : i32
    %c0_i32_0 = arith.constant 0 : i32
    %c0_i32_1 = arith.constant 0 : i32
    return %c0_i32, %c0_i32_0 : i32, i32
  }
  func.func @transform_6(%arg0: i32) -> (i32, i32) {
    %c0_i32 = arith.constant 0 : i32
    %c0_i32_0 = arith.constant 0 : i32
    %c0_i32_1 = arith.constant 0 : i32
    return %c0_i32, %c0_i32_0 : i32, i32
  }
  func.func @transform_7(%arg0: i32) -> (i32, i32, i32) {
    %c0_i32 = arith.constant 0 : i32
    %c0_i32_0 = arith.constant 0 : i32
    %c0_i32_1 = arith.constant 0 : i32
    return %arg0, %c0_i32, %c0_i32_0 : i32, i32, i32
  }
}

</mosaic_0001>

<llo_original>
// kernel: tpu_custom_call.1
$region0: #{tpu_custom_call.1}
  #allocation0 [shape = 'u32[]', space=smem, size = 0x4, offset = 0x4, fixed_abs, tag = 'smem constant byte address 0x4 - core index']
  #allocation1 [shape = 'u32[144,128]{1,0:T(1,128)}', space=vmem, size = 0x12000, scoped, tag = 'internal scratch']
  %s0 = inlined_call_operand.vmem [shape: bf16[2,18,8], index: 0, kind: input, shape index: {}]
  %s1 = inlined_call_operand.vmem [shape: bf16[3,8,16], index: 1, kind: input, shape index: {}]
  %s2 = inlined_call_operand.vmem [shape: f32[1,16], index: 2, kind: input, shape index: {}]
  %s3 = inlined_call_operand.vmem [shape: f32[1,16], index: 3, kind: input, shape index: {}]
  %s4 = inlined_call_operand.vmem [shape: f32[1,16], index: 4, kind: input, shape index: {}]
  %s5 = inlined_call_operand.vmem [shape: f32[8,16], index: 5, kind: input, shape index: {}]
  %s6 = inlined_call_operand.vmem [shape: f32[16,8], index: 6, kind: input, shape index: {}]
  %s7 = inlined_call_operand.hbm [shape: f32[2,16,16], index: 7, kind: output, shape index: {}]
  %s8 = sld [smem:[#allocation0]]
  $region61: #{tpu_custom_call.1} parent=0
    _
  %s10 = ssub.s32 1, %s8
  %s11 = scalar_select 0, %s10, %s8
  $region1: #{tpu_custom_call.1} parent=0
    #allocation2 [shape = 'u8[16384]{0}', space=vmem, size = 0x4000, scoped, tag = 'output window, operand 0']
    #allocation3 [shape = 's32[2]{0}', space=sflag, size = 0x8, scoped, tag = 'scoped memory for tpu_custom_call.1']
    %12 = vsyncpa [#allocation3], 0
    %s13 = scalar_lea.sflag [#allocation3], 1
    %14 = vsyncpa %s13, 0
    loop: start=0, step=1, limit=4
    $region2: #{tpu_custom_call.1} parent=1 // loop_pre_header
      _
    $region3: #{tpu_custom_call.1} parent=1 // loop_header
      %s16 = sphi 0, %s20
      %p17 = scmp.ge.s32.totalorder %s16, 4
      %s26 = sphi 0, %s28
      %s29 = sphi 0, %s26
      %s30 = sphi 0, %s29
      %s46 = sphi 0, %s30
      %s50 = sphi 0, %s50
      %s52 = sphi 0, %s50
      %s53 = sphi 0, %s52
      %s67 = sphi 0, %s53
      %s71 = sphi 0, %s71
      %s73 = sphi 0, %s71
      %s74 = sphi 0, %s73
      %s88 = sphi 0, %s74
      %s92 = sphi 0, %s92
      %s94 = sphi 0, %s92
      %s95 = sphi 0, %s94
      %s109 = sphi 0, %s95
      %s113 = sphi 0, %s113
      %s115 = sphi 0, %s113
      %s116 = sphi 0, %s115
      %s130 = sphi 0, %s116
      %s134 = sphi 0, %s134
      %s136 = sphi 0, %s134
      %s137 = sphi 0, %s136
      %s151 = sphi 0, %s137
      %s155 = sphi 0, %s155
      %s157 = sphi 0, %s155
      %s158 = sphi 0, %s157
      %s172 = sphi 0, %s158
      %s178 = sphi 0, %s180
      %s181 = sphi 0, %s178
      %s182 = sphi 0, %s181
      %s198 = sphi 0, %s182
    $region4: #{tpu_custom_call.1} parent=1 // loop_header_branch
      %19 = sbr.rel (%p17) target = $region8
    $region5: #{tpu_custom_call.1} parent=1 // loop_body
      %s21 = ssub.s32 %s16, 1
      %s22 = ssub.s32 %s16, 2
      %s23 = sadd.s32 %s16, 1
      %s24 = ssub.s32 %s16, %s23
      %p25 = scmp.eq.s32.totalorder %s24, 0
      %s27 = sadd.s32 %s26, 1
      %s28 = scalar_select %p25, %s26, %s27
      %p31 = pneg %p25
      %p32 = scmp.eq.s32.totalorder %s16, 1
      %p33 = por %p31, %p32
      %p34 = scmp.ne.s32.totalorder %s26, %s29
      %p35 = scmp.eq.s32.totalorder %s16, 0
      %p36 = por %p34, %p35
      %p37 = scmp.ne.s32.totalorder %s26, %s29
      %p38 = scmp.eq.s32.totalorder %s21, 1
      %p39 = por %p37, %p38
      %p40 = scmp.ne.s32.totalorder %s29, %s30
      %p41 = scmp.eq.s32.totalorder %s21, 0
      %p42 = por %p40, %p41
      %p43 = scmp.ne.s32.totalorder %s29, %s30
      %p44 = scmp.eq.s32.totalorder %s22, 1
      %p45 = por %p43, %p44
      %p47 = scmp.ne.s32.totalorder %s30, %s46
      %p48 = scmp.eq.s32.totalorder %s22, 0
      %p49 = por %p47, %p48
      %s51 = sadd.s32 %s50, 1
      %p54 = scmp.eq.s32.totalorder %s16, 1
      %p55 = scmp.ne.s32.totalorder %s50, %s52
      %p56 = scmp.eq.s32.totalorder %s16, 0
      %p57 = por %p55, %p56
      %p58 = scmp.ne.s32.totalorder %s50, %s52
      %p59 = scmp.eq.s32.totalorder %s21, 1
      %p60 = por %p58, %p59
      %p61 = scmp.ne.s32.totalorder %s52, %s53
      %p62 = scmp.eq.s32.totalorder %s21, 0
      %p63 = por %p61, %p62
      %p64 = scmp.ne.s32.totalorder %s52, %s53
      %p65 = scmp.eq.s32.totalorder %s22, 1
      %p66 = por %p64, %p65
      %p68 = scmp.ne.s32.totalorder %s53, %s67
      %p69 = scmp.eq.s32.totalorder %s22, 0
      %p70 = por %p68, %p69
      %s72 = sadd.s32 %s71, 1
      %p75 = scmp.eq.s32.totalorder %s16, 1
      %p76 = scmp.ne.s32.totalorder %s71, %s73
      %p77 = scmp.eq.s32.totalorder %s16, 0
      %p78 = por %p76, %p77
      %p79 = scmp.ne.s32.totalorder %s71, %s73
      %p80 = scmp.eq.s32.totalorder %s21, 1
      %p81 = por %p79, %p80
      %p82 = scmp.ne.s32.totalorder %s73, %s74
      %p83 = scmp.eq.s32.totalorder %s21, 0
      %p84 = por %p82, %p83
      %p85 = scmp.ne.s32.totalorder %s73, %s74
      %p86 = scmp.eq.s32.totalorder %s22, 1
      %p87 = por %p85, %p86
      %p89 = scmp.ne.s32.totalorder %s74, %s88
      %p90 = scmp.eq.s32.totalorder %s22, 0
      %p91 = por %p89, %p90
      %s93 = sadd.s32 %s92, 1
      %p96 = scmp.eq.s32.totalorder %s16, 1
      %p97 = scmp.ne.s32.totalorder %s92, %s94
      %p98 = scmp.eq.s32.totalorder %s16, 0
      %p99 = por %p97, %p98
      %p100 = scmp.ne.s32.totalorder %s92, %s94
      %p101 = scmp.eq.s32.totalorder %s21, 1
      %p102 = por %p100, %p101
      %p103 = scmp.ne.s32.totalorder %s94, %s95
      %p104 = scmp.eq.s32.totalorder %s21, 0
      %p105 = por %p103, %p104
      %p106 = scmp.ne.s32.totalorder %s94, %s95
      %p107 = scmp.eq.s32.totalorder %s22, 1
      %p108 = por %p106, %p107
      %p110 = scmp.ne.s32.totalorder %s95, %s109
      %p111 = scmp.eq.s32.totalorder %s22, 0
      %p112 = por %p110, %p111
      %s114 = sadd.s32 %s113, 1
      %p117 = scmp.eq.s32.totalorder %s16, 1
      %p118 = scmp.ne.s32.totalorder %s113, %s115
      %p119 = scmp.eq.s32.totalorder %s16, 0
      %p120 = por %p118, %p119
      %p121 = scmp.ne.s32.totalorder %s113, %s115
      %p122 = scmp.eq.s32.totalorder %s21, 1
      %p123 = por %p121, %p122
      %p124 = scmp.ne.s32.totalorder %s115, %s116
      %p125 = scmp.eq.s32.totalorder %s21, 0
      %p126 = por %p124, %p125
      %p127 = scmp.ne.s32.totalorder %s115, %s116
      %p128 = scmp.eq.s32.totalorder %s22, 1
      %p129 = por %p127, %p128
      %p131 = scmp.ne.s32.totalorder %s116, %s130
      %p132 = scmp.eq.s32.totalorder %s22, 0
      %p133 = por %p131, %p132
      %s135 = sadd.s32 %s134, 1
      %p138 = scmp.eq.s32.totalorder %s16, 1
      %p139 = scmp.ne.s32.totalorder %s134, %s136
      %p140 = scmp.eq.s32.totalorder %s16, 0
      %p141 = por %p139, %p140
      %p142 = scmp.ne.s32.totalorder %s134, %s136
      %p143 = scmp.eq.s32.totalorder %s21, 1
      %p144 = por %p142, %p143
      %p145 = scmp.ne.s32.totalorder %s136, %s137
      %p146 = scmp.eq.s32.totalorder %s21, 0
      %p147 = por %p145, %p146
      %p148 = scmp.ne.s32.totalorder %s136, %s137
      %p149 = scmp.eq.s32.totalorder %s22, 1
      %p150 = por %p148, %p149
      %p152 = scmp.ne.s32.totalorder %s137, %s151
      %p153 = scmp.eq.s32.totalorder %s22, 0
      %p154 = por %p152, %p153
      %s156 = sadd.s32 %s155, 1
      %p159 = scmp.eq.s32.totalorder %s16, 1
      %p160 = scmp.ne.s32.totalorder %s155, %s157
      %p161 = scmp.eq.s32.totalorder %s16, 0
      %p162 = por %p160, %p161
      %p163 = scmp.ne.s32.totalorder %s155, %s157
      %p164 = scmp.eq.s32.totalorder %s21, 1
      %p165 = por %p163, %p164
      %p166 = scmp.ne.s32.totalorder %s157, %s158
      %p167 = scmp.eq.s32.totalorder %s21, 0
      %p168 = por %p166, %p167
      %p169 = scmp.ne.s32.totalorder %s157, %s158
      %p170 = scmp.eq.s32.totalorder %s22, 1
      %p171 = por %p169, %p170
      %p173 = scmp.ne.s32.totalorder %s158, %s172
      %p174 = scmp.eq.s32.totalorder %s22, 0
      %p175 = por %p173, %p174
      %s176 = ssub.s32 %s16, %s23
      %p177 = scmp.eq.s32.totalorder %s176, 0
      %s179 = sadd.s32 %s178, 1
      %s180 = scalar_select %p177, %s178, %s179
      %p183 = pneg %p177
      %p184 = scmp.eq.s32.totalorder %s16, 1
      %p185 = por %p183, %p184
      %p186 = scmp.ne.s32.totalorder %s178, %s181
      %p187 = scmp.eq.s32.totalorder %s16, 0
      %p188 = por %p186, %p187
      %p189 = scmp.ne.s32.totalorder %s178, %s181
      %p190 = scmp.eq.s32.totalorder %s21, 1
      %p191 = por %p189, %p190
      %p192 = scmp.ne.s32.totalorder %s181, %s182
      %p193 = scmp.eq.s32.totalorder %s21, 0
      %p194 = por %p192, %p193
      %p195 = scmp.ne.s32.totalorder %s181, %s182
      %p196 = scmp.eq.s32.totalorder %s22, 1
      %p197 = por %p195, %p196
      %p199 = scmp.ne.s32.totalorder %s182, %s198
      %p200 = scmp.eq.s32.totalorder %s22, 0
      %p201 = por %p199, %p200
      %p202 = scmp.le.s32.totalorder 1, %s16
      %p203 = scmp.lt.s32.totalorder %s16, 3
      %p204 = pnand %p202, %p203
      %p205 = pneg %p204
      // Predicated region
      $region9: #{tpu_custom_call.1} parent=5 // pred_check
        _
      $region10: #{tpu_custom_call.1} parent=5 // pred_check_branch
        %207 = sbr.rel (%p204) target = $region12
      $region11: #{tpu_custom_call.1} parent=5 // pred_region
        %s208 = ssub.s32 %s16, 1
        // Predicated region
        $region13: #{tpu_custom_call.1} parent=11 // pred_check
          %p209 = pneg %p63
        $region14: #{tpu_custom_call.1} parent=11 // pred_check_branch
          %211 = sbr.rel (%p209) target = $region16
        $region15: #{tpu_custom_call.1} parent=11 // pred_region
          _
        $region16: #{tpu_custom_call.1} parent=11 // pred_fallthru
          _
        // Predicated region
        $region17: #{tpu_custom_call.1} parent=11 // pred_check
          %p212 = pneg %p84
        $region18: #{tpu_custom_call.1} parent=11 // pred_check_branch
          %214 = sbr.rel (%p212) target = $region20
        $region19: #{tpu_custom_call.1} parent=11 // pred_region
          _
        $region20: #{tpu_custom_call.1} parent=11 // pred_fallthru
          _
        // Predicated region
        $region21: #{tpu_custom_call.1} parent=11 // pred_check
          %p215 = pneg %p105
        $region22: #{tpu_custom_call.1} parent=11 // pred_check_branch
          %217 = sbr.rel (%p215) target = $region24
        $region23: #{tpu_custom_call.1} parent=11 // pred_region
          _
        $region24: #{tpu_custom_call.1} parent=11 // pred_fallthru
          _
        // Predicated region
        $region25: #{tpu_custom_call.1} parent=11 // pred_check
          %p218 = pneg %p126
        $region26: #{tpu_custom_call.1} parent=11 // pred_check_branch
          %220 = sbr.rel (%p218) target = $region28
        $region27: #{tpu_custom_call.1} parent=11 // pred_region
          _
        $region28: #{tpu_custom_call.1} parent=11 // pred_fallthru
          _
        // Predicated region
        $region29: #{tpu_custom_call.1} parent=11 // pred_check
          %p221 = pneg %p147
        $region30: #{tpu_custom_call.1} parent=11 // pred_check_branch
          %223 = sbr.rel (%p221) target = $region32
        $region31: #{tpu_custom_call.1} parent=11 // pred_region
          _
        $region32: #{tpu_custom_call.1} parent=11 // pred_fallthru
          _
        // Predicated region
        $region33: #{tpu_custom_call.1} parent=11 // pred_check
          %p224 = pneg %p168
        $region34: #{tpu_custom_call.1} parent=11 // pred_check_branch
          %226 = sbr.rel (%p224) target = $region36
        $region35: #{tpu_custom_call.1} parent=11 // pred_region
          _
        $region36: #{tpu_custom_call.1} parent=11 // pred_fallthru
          _
      $region12: #{tpu_custom_call.1} parent=5 // pred_fallthru
        _
      %p227 = scmp.lt.s32.totalorder %s16, 2
      // Predicated region
      $region37: #{tpu_custom_call.1} parent=5 // pred_check
        %p228 = pneg %p227
      $region38: #{tpu_custom_call.1} parent=5 // pred_check_branch
        %230 = sbr.rel (%p228) target = $region40
      $region39: #{tpu_custom_call.1} parent=5 // pred_region
        // Predicated region
        $region41: #{tpu_custom_call.1} parent=39 // pred_check
          %p231 = pneg %p36
        $region42: #{tpu_custom_call.1} parent=39 // pred_check_branch
          %233 = sbr.rel (%p231) target = $region44
        $region43: #{tpu_custom_call.1} parent=39 // pred_region
          %p234 = scmp.lt.s32.totalorder %s16, 1
          %s235 = scalar_select %p234, %s16, 1
          %s236 = smul.addr %s235, 3
          %s237 = smul.addr %s236, 4
          %s238 = scalar_lea.vmem %s0, %s237
        $region44: #{tpu_custom_call.1} parent=39 // pred_fallthru
          _
      $region40: #{tpu_custom_call.1} parent=5 // pred_fallthru
        _
      %p239 = scmp.le.s32.totalorder 1, %s16
      %p240 = scmp.lt.s32.totalorder %s16, 3
      %p241 = pnand %p239, %p240
      %p242 = pneg %p241
      // Predicated region
      $region45: #{tpu_custom_call.1} parent=5 // pred_check
        _
      $region46: #{tpu_custom_call.1} parent=5 // pred_check_branch
        %244 = sbr.rel (%p241) target = $region48
      $region47: #{tpu_custom_call.1} parent=5 // pred_region
        %s245 = ssub.s32 %s16, 1
        %p246 = scmp.lt.s32.totalorder %s21, 1
        %s247 = scalar_select %p246, %s21, 1
        %s248 = smul.addr %s247, 3
        %s249 = smul.addr %s248, 4
        %s250 = scalar_lea.vmem %s0, %s249
        %p251 = pneg %p42
        %p252 = pneg %p39
        %p253 = pneg %p63
        %p254 = pneg %p60
        %p255 = pneg %p84
        %p256 = pneg %p81
        %p257 = pneg %p105
        %p258 = pneg %p102
        %p259 = pneg %p126
        %p260 = pneg %p123
        %p261 = pneg %p147
        %p262 = pneg %p144
        %p263 = pneg %p168
        %p264 = pneg %p165
        %p265 = pneg %p194
        %p266 = pneg %p191
        %s267 = sand.u32 %s181, 1
        %s268 = scalar_lea.sflag [#allocation3], %s267
        %s269 = sand.u32 %s181, 1
        %s270 = smul.addr %s269, 16
        %s271 = scalar_lea.vmem [#allocation2], %s270
        %p272 = scmp.lt.s32.totalorder %s21, 1
        %s273 = scalar_select %p272, %s21, 1
        %s274 = smul.addr %s273, 3
        %s275 = smul.addr %s274, 4
        %s276 = scalar_lea.vmem %s0, %s275
        %v278 = vld [vmem:[%s276] sm:$0xf]
        %v279 = vld [vmem:[%s276 + $0x4] sm:$0xf]
        %v280 = vld [vmem:[%s1] sm:$0xf]
        %v281 = vld [vmem:[%s276 + $0x8] sm:$0x1]
        %s282 = scalar_lea.vmem %s1, 4
        %v283 = vld [vmem:[%s282] sm:$0xf]
        %v287 = vunpack.c.l.b16 %v278
        %v288 = vunpack.c.l.b16 %v279
        %v289 = vunpack.c.l.b16 %v281
        %v290 = vpack.c.b16 %v288, %v287
        %v291 = vpack.c.b16 %v289, %v289
        %vm292 = vsmask.f32 7424
        %v294 = vshrl.u32 %v290, 16
        %v296 = vshll.u32 %v290, 16
        %v298 = vrot.slane %v296, 1
        %v299 = vor.u32 %v294, %v298
        %v301 = vshll.u32 %v291, 16
        %v303 = vrot.slane %v301, 1
        %v304 = vsel %vm292, %v299, %v303
        %vm305 = vcmask 64512
        %v307 = vsel %vm305, %v304, 0
        %vm309 = vcmask 1043456
        %v311 = vsel %vm309, %v283, 0
        %313 = vmatprep.subr.bf16.mxu0 0
        %314 = vmatpush1.bf16.msra.mxu0 0
        %315 = vmatprep.subr.bf16.mxu0 0
        %316 = vmatpush1.bf16.msra.mxu0 0
        %317 = vmatprep.subr.bf16.mxu0 0
        %318 = vmatpush1.bf16.msra.mxu0 0
        %319 = vmatprep.subr.bf16.mxu0 0
        %320 = vmatpush1.bf16.msra.mxu0 0
        %321 = vmatprep.subr.bf16.mxu0 0
        %322 = vmatpush1.bf16.msra.mxu0 0
        %323 = vmatprep.subr.bf16.mxu0 0
        %324 = vmatpush1.bf16.msra.mxu0 0
        %325 = vmatprep.subr.bf16.mxu0 0
        %326 = vmatpush1.bf16.msra.mxu0 0
        %327 = vmatprep.subr.bf16.mxu0 0
        %328 = vmatpush1.bf16.msra.mxu0 %v311
        %329 = vmatprep.subr.bf16.mxu0 0
        %330 = vmatpush2.bf16.msra.mxu0 0
        %331 = vmatprep.subr.bf16.mxu0 0
        %332 = vmatpush2.bf16.msra.mxu0 0
        %333 = vmatprep.subr.bf16.mxu0 0
        %334 = vmatpush2.bf16.msra.mxu0 0
        %335 = vmatprep.subr.bf16.mxu0 0
        %336 = vmatpush2.bf16.msra.mxu0 0
        %337 = vmatprep.subr.bf16.mxu0 0
        %338 = vmatpush2.bf16.msra.mxu0 0
        %339 = vmatprep.subr.bf16.mxu0 0
        %340 = vmatpush2.bf16.msra.mxu0 0
        %341 = vmatprep.subr.bf16.mxu0 0
        %342 = vmatpush2.bf16.msra.mxu0 0
        %343 = vmatprep.subr.bf16.mxu0 0
        %344 = vmatpush2.bf16.msra.mxu0 0
        %345 = vmatprep.mubr.bf16.mxu0 0
        %346 = vmatmul.mubr.bf16.gmra.mxu0 %v307
        %v347 = vpop.f32.mrf.mxu0
        %v348 = vadd.f32 0.0, %v347
        %v349 = vpop.f32.mrf.mxu0
        %v350 = vpop.f32.mrf.mxu0
        %v351 = vadd.f32 0.0, %v350
        %v352 = vpop.f32.mrf.mxu0
        %353 = vdwg.mxu0
        %v354 = vsel %vm305, %v290, 0
        %v357 = vsel %vm309, %v280, 0
        %359 = vmatprep.subr.bf16.mxu0 0
        %360 = vmatpush1.bf16.msra.mxu0 0
        %361 = vmatprep.subr.bf16.mxu0 0
        %362 = vmatpush1.bf16.msra.mxu0 0
        %363 = vmatprep.subr.bf16.mxu0 0
        %364 = vmatpush1.bf16.msra.mxu0 0
        %365 = vmatprep.subr.bf16.mxu0 0
        %366 = vmatpush1.bf16.msra.mxu0 0
        %367 = vmatprep.subr.bf16.mxu0 0
        %368 = vmatpush1.bf16.msra.mxu0 0
        %369 = vmatprep.subr.bf16.mxu0 0
        %370 = vmatpush1.bf16.msra.mxu0 0
        %371 = vmatprep.subr.bf16.mxu0 0
        %372 = vmatpush1.bf16.msra.mxu0 0
        %373 = vmatprep.subr.bf16.mxu0 0
        %374 = vmatpush1.bf16.msra.mxu0 %v357
        %375 = vmatprep.subr.bf16.mxu0 0
        %376 = vmatpush2.bf16.msra.mxu0 0
        %377 = vmatprep.subr.bf16.mxu0 0
        %378 = vmatpush2.bf16.msra.mxu0 0
        %379 = vmatprep.subr.bf16.mxu0 0
        %380 = vmatpush2.bf16.msra.mxu0 0
        %381 = vmatprep.subr.bf16.mxu0 0
        %382 = vmatpush2.bf16.msra.mxu0 0
        %383 = vmatprep.subr.bf16.mxu0 0
        %384 = vmatpush2.bf16.msra.mxu0 0
        %385 = vmatprep.subr.bf16.mxu0 0
        %386 = vmatpush2.bf16.msra.mxu0 0
        %387 = vmatprep.subr.bf16.mxu0 0
        %388 = vmatpush2.bf16.msra.mxu0 0
        %389 = vmatprep.subr.bf16.mxu0 0
        %390 = vmatpush2.bf16.msra.mxu0 0
        %391 = vmatprep.mubr.bf16.mxu0 0
        %392 = vmatmul.mubr.bf16.gmra.mxu0 %v354
        %v393 = vpop.f32.mrf.mxu0
        %v394 = vadd.f32 %v348, %v393
        %v395 = vpop.f32.mrf.mxu0
        %v396 = vpop.f32.mrf.mxu0
        %v397 = vadd.f32 %v351, %v396
        %v398 = vpop.f32.mrf.mxu0
        %399 = vdwg.mxu0
        %v400 = vld [vmem:[%s276] sm:$0xe]
        %s401 = scalar_lea.vmem %s1, 8
        %v402 = vld [vmem:[%s401] sm:$0xf]
        %v404 = vunpack.c.l.b16 %v400
        %v405 = vpack.c.b16 %v288, %v404
        %vm406 = vcmask 1046528
        %v407 = vrot.slane %v405, 1
        %v408 = vrot.slane %v291, 1
        %v409 = vsel %vm406, %v407, %v408
        %v411 = vsel %vm305, %v409, 0
        %v414 = vsel %vm309, %v402, 0
        %416 = vmatprep.subr.bf16.mxu0 0
        %417 = vmatpush1.bf16.msra.mxu0 0
        %418 = vmatprep.subr.bf16.mxu0 0
        %419 = vmatpush1.bf16.msra.mxu0 0
        %420 = vmatprep.subr.bf16.mxu0 0
        %421 = vmatpush1.bf16.msra.mxu0 0
        %422 = vmatprep.subr.bf16.mxu0 0
        %423 = vmatpush1.bf16.msra.mxu0 0
        %424 = vmatprep.subr.bf16.mxu0 0
        %425 = vmatpush1.bf16.msra.mxu0 0
        %426 = vmatprep.subr.bf16.mxu0 0
        %427 = vmatpush1.bf16.msra.mxu0 0
        %428 = vmatprep.subr.bf16.mxu0 0
        %429 = vmatpush1.bf16.msra.mxu0 0
        %430 = vmatprep.subr.bf16.mxu0 0
        %431 = vmatpush1.bf16.msra.mxu0 %v414
        %432 = vmatprep.subr.bf16.mxu0 0
        %433 = vmatpush2.bf16.msra.mxu0 0
        %434 = vmatprep.subr.bf16.mxu0 0
        %435 = vmatpush2.bf16.msra.mxu0 0
        %436 = vmatprep.subr.bf16.mxu0 0
        %437 = vmatpush2.bf16.msra.mxu0 0
        %438 = vmatprep.subr.bf16.mxu0 0
        %439 = vmatpush2.bf16.msra.mxu0 0
        %440 = vmatprep.subr.bf16.mxu0 0
        %441 = vmatpush2.bf16.msra.mxu0 0
        %442 = vmatprep.subr.bf16.mxu0 0
        %443 = vmatpush2.bf16.msra.mxu0 0
        %444 = vmatprep.subr.bf16.mxu0 0
        %445 = vmatpush2.bf16.msra.mxu0 0
        %446 = vmatprep.subr.bf16.mxu0 0
        %447 = vmatpush2.bf16.msra.mxu0 0
        %448 = vmatprep.mubr.bf16.mxu0 0
        %449 = vmatmul.mubr.bf16.gmra.mxu0 %v411
        %v450 = vpop.f32.mrf.mxu0
        %v451 = vadd.f32 0.0, %v450
        %v452 = vpop.f32.mrf.mxu0
        %v453 = vpop.f32.mrf.mxu0
        %v454 = vadd.f32 0.0, %v453
        %v455 = vpop.f32.mrf.mxu0
        %456 = vdwg.mxu0
        %v457 = vadd.f32 %v394, %v451
        %v458 = vadd.f32 %v397, %v454
        %v459 = vld [vmem:[%s2] sm:$0x1]
        %vm460 = vcmask 130048
        %v461 = vsel %vm460, %v457, 0.0
        %v462 = vsel %vm460, %v458, 0.0
        %v463 = vadd.f32 %v461, %v462
        %v464 = vrot.slane %v463, 4
        %v465 = vadd.f32 %v463, %v464
        %v466 = vrot.slane %v465, 2
        %v467 = vadd.f32 %v465, %v466
        %v468 = vrot.slane %v467, 1
        %v469 = vadd.f32 %v467, %v468
        %v470 = vmul.f32 %v457, %v457
        %v471 = vmul.f32 %v458, %v458
        %v472 = vsel %vm460, %v470, 0.0
        %v473 = vsel %vm460, %v471, 0.0
        %v474 = vadd.f32 %v472, %v473
        %v475 = vrot.slane %v474, 4
        %v476 = vadd.f32 %v474, %v475
        %v477 = vrot.slane %v476, 2
        %v478 = vadd.f32 %v476, %v477
        %v479 = vrot.slane %v478, 1
        %v480 = vadd.f32 %v478, %v479
        %v481 = vmul.f32 %v459, 16.0
        %v482 = vadd.f32 %v469, %v481
        %v483 = vmul.f32 %v459, 2.0
        %v484 = vmul.f32 %v483, %v469
        %v485 = vadd.f32 %v480, %v484
        %v486 = vmul.f32 %v459, %v459
        %v487 = vmul.f32 %v486, 16.0
        %v488 = vadd.f32 %v485, %v487
        %v489 = vld [vmem:[%s6] sm:$0xff]
        %v490 = vld [vmem:[%s6 + $0x8] sm:$0xff]
        %v492 = vsel %vm460, %v482, 0
        %494 = vmatprep.subr.mxu0 0.0
        %495 = vmatpush1.msra.mxu0 0.0
        %496 = vmatprep.subr.mxu0 0.0
        %497 = vmatpush1.msra.mxu0 0.0
        %498 = vmatprep.subr.mxu0 0.0
        %499 = vmatpush1.msra.mxu0 0.0
        %500 = vmatprep.subr.mxu0 0.0
        %501 = vmatpush1.msra.mxu0 0.0
        %502 = vmatprep.subr.mxu0 0.0
        %503 = vmatpush1.msra.mxu0 0.0
        %504 = vmatprep.subr.mxu0 0.0
        %505 = vmatpush1.msra.mxu0 0.0
        %506 = vmatprep.subr.mxu0 0.0
        %507 = vmatpush1.msra.mxu0 0.0
        %508 = vmatprep.subr.mxu0 0.0
        %509 = vmatpush1.msra.mxu0 0.0
        %510 = vmatprep.subr.mxu0 0.0
        %511 = vmatpush1.msra.mxu0 0.0
        %512 = vmatprep.subr.mxu0 0.0
        %513 = vmatpush1.msra.mxu0 0.0
        %514 = vmatprep.subr.mxu0 0.0
        %515 = vmatpush1.msra.mxu0 0.0
        %516 = vmatprep.subr.mxu0 0.0
        %517 = vmatpush1.msra.mxu0 0.0
        %518 = vmatprep.subr.mxu0 0.0
        %519 = vmatpush1.msra.mxu0 0.0
        %520 = vmatprep.subr.mxu0 0.0
        %521 = vmatpush1.msra.mxu0 0.0
        %522 = vmatprep.subr.mxu0 0.0
        %523 = vmatpush1.msra.mxu0 %v490
        %524 = vmatprep.subr.mxu0 0.0
        %525 = vmatpush1.msra.mxu0 %v489
        %526 = vmatprep.subr.mxu0 0.0
        %527 = vmatpush2.msra.mxu0 0.0
        %528 = vmatprep.subr.mxu0 0.0
        %529 = vmatpush2.msra.mxu0 0.0
        %530 = vmatprep.subr.mxu0 0.0
        %531 = vmatpush2.msra.mxu0 0.0
        %532 = vmatprep.subr.mxu0 0.0
        %533 = vmatpush2.msra.mxu0 0.0
        %534 = vmatprep.subr.mxu0 0.0
        %535 = vmatpush2.msra.mxu0 0.0
        %536 = vmatprep.subr.mxu0 0.0
        %537 = vmatpush2.msra.mxu0 0.0
        %538 = vmatprep.subr.mxu0 0.0
        %539 = vmatpush2.msra.mxu0 0.0
        %540 = vmatprep.subr.mxu0 0.0
        %541 = vmatpush2.msra.mxu0 0.0
        %542 = vmatprep.subr.mxu0 0.0
        %543 = vmatpush2.msra.mxu0 0.0
        %544 = vmatprep.subr.mxu0 0.0
        %545 = vmatpush2.msra.mxu0 0.0
        %546 = vmatprep.subr.mxu0 0.0
        %547 = vmatpush2.msra.mxu0 0.0
        %548 = vmatprep.subr.mxu0 0.0
        %549 = vmatpush2.msra.mxu0 0.0
        %550 = vmatprep.subr.mxu0 0.0
        %551 = vmatpush2.msra.mxu0 0.0
        %552 = vmatprep.subr.mxu0 0.0
        %553 = vmatpush2.msra.mxu0 0.0
        %554 = vmatprep.subr.mxu0 0.0
        %555 = vmatpush2.msra.mxu0 0.0
        %556 = vmatprep.subr.mxu0 0.0
        %557 = vmatpush2.msra.mxu0 0.0
        %558 = vmatprep.mubr.f32.mxu0 0.0
        %559 = vmatmul.mubr.f32.gmra.mxu0 %v492
        %v560 = vpop.f32.mrf.mxu0
        %v561 = vadd.f32 0.0, %v560
        %v562 = vpop.f32.mrf.mxu0
        %563 = vdwg.mxu0
        %v565 = vsel %vm460, %v488, 0
        %567 = vmatprep.subr.mxu0 0.0
        %568 = vmatpush1.msra.mxu0 0.0
        %569 = vmatprep.subr.mxu0 0.0
        %570 = vmatpush1.msra.mxu0 0.0
        %571 = vmatprep.subr.mxu0 0.0
        %572 = vmatpush1.msra.mxu0 0.0
        %573 = vmatprep.subr.mxu0 0.0
        %574 = vmatpush1.msra.mxu0 0.0
        %575 = vmatprep.subr.mxu0 0.0
        %576 = vmatpush1.msra.mxu0 0.0
        %577 = vmatprep.subr.mxu0 0.0
        %578 = vmatpush1.msra.mxu0 0.0
        %579 = vmatprep.subr.mxu0 0.0
        %580 = vmatpush1.msra.mxu0 0.0
        %581 = vmatprep.subr.mxu0 0.0
        %582 = vmatpush1.msra.mxu0 0.0
        %583 = vmatprep.subr.mxu0 0.0
        %584 = vmatpush1.msra.mxu0 0.0
        %585 = vmatprep.subr.mxu0 0.0
        %586 = vmatpush1.msra.mxu0 0.0
        %587 = vmatprep.subr.mxu0 0.0
        %588 = vmatpush1.msra.mxu0 0.0
        %589 = vmatprep.subr.mxu0 0.0
        %590 = vmatpush1.msra.mxu0 0.0
        %591 = vmatprep.subr.mxu0 0.0
        %592 = vmatpush1.msra.mxu0 0.0
        %593 = vmatprep.subr.mxu0 0.0
        %594 = vmatpush1.msra.mxu0 0.0
        %595 = vmatprep.subr.mxu0 0.0
        %596 = vmatpush1.msra.mxu0 %v490
        %597 = vmatprep.subr.mxu0 0.0
        %598 = vmatpush1.msra.mxu0 %v489
        %599 = vmatprep.subr.mxu0 0.0
        %600 = vmatpush2.msra.mxu0 0.0
        %601 = vmatprep.subr.mxu0 0.0
        %602 = vmatpush2.msra.mxu0 0.0
        %603 = vmatprep.subr.mxu0 0.0
        %604 = vmatpush2.msra.mxu0 0.0
        %605 = vmatprep.subr.mxu0 0.0
        %606 = vmatpush2.msra.mxu0 0.0
        %607 = vmatprep.subr.mxu0 0.0
        %608 = vmatpush2.msra.mxu0 0.0
        %609 = vmatprep.subr.mxu0 0.0
        %610 = vmatpush2.msra.mxu0 0.0
        %611 = vmatprep.subr.mxu0 0.0
        %612 = vmatpush2.msra.mxu0 0.0
        %613 = vmatprep.subr.mxu0 0.0
        %614 = vmatpush2.msra.mxu0 0.0
        %615 = vmatprep.subr.mxu0 0.0
        %616 = vmatpush2.msra.mxu0 0.0
        %617 = vmatprep.subr.mxu0 0.0
        %618 = vmatpush2.msra.mxu0 0.0
        %619 = vmatprep.subr.mxu0 0.0
        %620 = vmatpush2.msra.mxu0 0.0
        %621 = vmatprep.subr.mxu0 0.0
        %622 = vmatpush2.msra.mxu0 0.0
        %623 = vmatprep.subr.mxu0 0.0
        %624 = vmatpush2.msra.mxu0 0.0
        %625 = vmatprep.subr.mxu0 0.0
        %626 = vmatpush2.msra.mxu0 0.0
        %627 = vmatprep.subr.mxu0 0.0
        %628 = vmatpush2.msra.mxu0 0.0
        %629 = vmatprep.subr.mxu0 0.0
        %630 = vmatpush2.msra.mxu0 0.0
        %631 = vmatprep.mubr.f32.mxu0 0.0
        %632 = vmatmul.mubr.f32.gmra.mxu0 %v565
        %v633 = vpop.f32.mrf.mxu0
        %v634 = vadd.f32 0.0, %v633
        %v635 = vpop.f32.mrf.mxu0
        %636 = vdwg.mxu0
        %v637 = vmul.f32 %v561, 0.03125
        %v638 = vmul.f32 %v634, 0.03125
        %v639 = vmul.f32 %v637, %v637
        %v640 = vsub.f32 %v638, %v639
        %v641 = vmax.f32 %v640, 0.0
        %v642 = vadd.f32 %v641, 1e-05
        %v643 = vrsqrt.pop %v642
        %v644 = vld [vmem:[%s5] sm:$0xff]
        %v646 = vsel %vm305, %v637, 0
        %648 = vmatprep.subr.mxu0 0.0
        %649 = vmatpush1.msra.mxu0 0.0
        %650 = vmatprep.subr.mxu0 0.0
        %651 = vmatpush1.msra.mxu0 0.0
        %652 = vmatprep.subr.mxu0 0.0
        %653 = vmatpush1.msra.mxu0 0.0
        %654 = vmatprep.subr.mxu0 0.0
        %655 = vmatpush1.msra.mxu0 0.0
        %656 = vmatprep.subr.mxu0 0.0
        %657 = vmatpush1.msra.mxu0 0.0
        %658 = vmatprep.subr.mxu0 0.0
        %659 = vmatpush1.msra.mxu0 0.0
        %660 = vmatprep.subr.mxu0 0.0
        %661 = vmatpush1.msra.mxu0 0.0
        %662 = vmatprep.subr.mxu0 0.0
        %663 = vmatpush1.msra.mxu0 0.0
        %664 = vmatprep.subr.mxu0 0.0
        %665 = vmatpush1.msra.mxu0 0.0
        %666 = vmatprep.subr.mxu0 0.0
        %667 = vmatpush1.msra.mxu0 0.0
        %668 = vmatprep.subr.mxu0 0.0
        %669 = vmatpush1.msra.mxu0 0.0
        %670 = vmatprep.subr.mxu0 0.0
        %671 = vmatpush1.msra.mxu0 0.0
        %672 = vmatprep.subr.mxu0 0.0
        %673 = vmatpush1.msra.mxu0 0.0
        %674 = vmatprep.subr.mxu0 0.0
        %675 = vmatpush1.msra.mxu0 0.0
        %676 = vmatprep.subr.mxu0 0.0
        %677 = vmatpush1.msra.mxu0 0.0
        %678 = vmatprep.subr.mxu0 0.0
        %679 = vmatpush1.msra.mxu0 %v644
        %680 = vmatprep.subr.mxu0 0.0
        %681 = vmatpush2.msra.mxu0 0.0
        %682 = vmatprep.subr.mxu0 0.0
        %683 = vmatpush2.msra.mxu0 0.0
        %684 = vmatprep.subr.mxu0 0.0
        %685 = vmatpush2.msra.mxu0 0.0
        %686 = vmatprep.subr.mxu0 0.0
        %687 = vmatpush2.msra.mxu0 0.0
        %688 = vmatprep.subr.mxu0 0.0
        %689 = vmatpush2.msra.mxu0 0.0
        %690 = vmatprep.subr.mxu0 0.0
        %691 = vmatpush2.msra.mxu0 0.0
        %692 = vmatprep.subr.mxu0 0.0
        %693 = vmatpush2.msra.mxu0 0.0
        %694 = vmatprep.subr.mxu0 0.0
        %695 = vmatpush2.msra.mxu0 0.0
        %696 = vmatprep.subr.mxu0 0.0
        %697 = vmatpush2.msra.mxu0 0.0
        %698 = vmatprep.subr.mxu0 0.0
        %699 = vmatpush2.msra.mxu0 0.0
        %700 = vmatprep.subr.mxu0 0.0
        %701 = vmatpush2.msra.mxu0 0.0
        %702 = vmatprep.subr.mxu0 0.0
        %703 = vmatpush2.msra.mxu0 0.0
        %704 = vmatprep.subr.mxu0 0.0
        %705 = vmatpush2.msra.mxu0 0.0
        %706 = vmatprep.subr.mxu0 0.0
        %707 = vmatpush2.msra.mxu0 0.0
        %708 = vmatprep.subr.mxu0 0.0
        %709 = vmatpush2.msra.mxu0 0.0
        %710 = vmatprep.subr.mxu0 0.0
        %711 = vmatpush2.msra.mxu0 0.0
        %712 = vmatprep.mubr.f32.mxu0 0.0
        %713 = vmatmul.mubr.f32.gmra.mxu0 %v646
        %v714 = vpop.f32.mrf.mxu0
        %v715 = vadd.f32 0.0, %v714
        %v716 = vpop.f32.mrf.mxu0
        %717 = vdwg.mxu0
        %v719 = vsel %vm305, %v643, 0
        %721 = vmatprep.subr.mxu0 0.0
        %722 = vmatpush1.msra.mxu0 0.0
        %723 = vmatprep.subr.mxu0 0.0
        %724 = vmatpush1.msra.mxu0 0.0
        %725 = vmatprep.subr.mxu0 0.0
        %726 = vmatpush1.msra.mxu0 0.0
        %727 = vmatprep.subr.mxu0 0.0
        %728 = vmatpush1.msra.mxu0 0.0
        %729 = vmatprep.subr.mxu0 0.0
        %730 = vmatpush1.msra.mxu0 0.0
        %731 = vmatprep.subr.mxu0 0.0
        %732 = vmatpush1.msra.mxu0 0.0
        %733 = vmatprep.subr.mxu0 0.0
        %734 = vmatpush1.msra.mxu0 0.0
        %735 = vmatprep.subr.mxu0 0.0
        %736 = vmatpush1.msra.mxu0 0.0
        %737 = vmatprep.subr.mxu0 0.0
        %738 = vmatpush1.msra.mxu0 0.0
        %739 = vmatprep.subr.mxu0 0.0
        %740 = vmatpush1.msra.mxu0 0.0
        %741 = vmatprep.subr.mxu0 0.0
        %742 = vmatpush1.msra.mxu0 0.0
        %743 = vmatprep.subr.mxu0 0.0
        %744 = vmatpush1.msra.mxu0 0.0
        %745 = vmatprep.subr.mxu0 0.0
        %746 = vmatpush1.msra.mxu0 0.0
        %747 = vmatprep.subr.mxu0 0.0
        %748 = vmatpush1.msra.mxu0 0.0
        %749 = vmatprep.subr.mxu0 0.0
        %750 = vmatpush1.msra.mxu0 0.0
        %751 = vmatprep.subr.mxu0 0.0
        %752 = vmatpush1.msra.mxu0 %v644
        %753 = vmatprep.subr.mxu0 0.0
        %754 = vmatpush2.msra.mxu0 0.0
        %755 = vmatprep.subr.mxu0 0.0
        %756 = vmatpush2.msra.mxu0 0.0
        %757 = vmatprep.subr.mxu0 0.0
        %758 = vmatpush2.msra.mxu0 0.0
        %759 = vmatprep.subr.mxu0 0.0
        %760 = vmatpush2.msra.mxu0 0.0
        %761 = vmatprep.subr.mxu0 0.0
        %762 = vmatpush2.msra.mxu0 0.0
        %763 = vmatprep.subr.mxu0 0.0
        %764 = vmatpush2.msra.mxu0 0.0
        %765 = vmatprep.subr.mxu0 0.0
        %766 = vmatpush2.msra.mxu0 0.0
        %767 = vmatprep.subr.mxu0 0.0
        %768 = vmatpush2.msra.mxu0 0.0
        %769 = vmatprep.subr.mxu0 0.0
        %770 = vmatpush2.msra.mxu0 0.0
        %771 = vmatprep.subr.mxu0 0.0
        %772 = vmatpush2.msra.mxu0 0.0
        %773 = vmatprep.subr.mxu0 0.0
        %774 = vmatpush2.msra.mxu0 0.0
        %775 = vmatprep.subr.mxu0 0.0
        %776 = vmatpush2.msra.mxu0 0.0
        %777 = vmatprep.subr.mxu0 0.0
        %778 = vmatpush2.msra.mxu0 0.0
        %779 = vmatprep.subr.mxu0 0.0
        %780 = vmatpush2.msra.mxu0 0.0
        %781 = vmatprep.subr.mxu0 0.0
        %782 = vmatpush2.msra.mxu0 0.0
        %783 = vmatprep.subr.mxu0 0.0
        %784 = vmatpush2.msra.mxu0 0.0
        %785 = vmatprep.mubr.f32.mxu0 0.0
        %786 = vmatmul.mubr.f32.gmra.mxu0 %v719
        %v787 = vpop.f32.mrf.mxu0
        %v788 = vadd.f32 0.0, %v787
        %v789 = vpop.f32.mrf.mxu0
        %790 = vdwg.mxu0
        %v791 = vld [vmem:[%s3] sm:$0x1]
        %v792 = vmul.f32 %v788, %v791
        %v793 = vld [vmem:[%s4] sm:$0x1]
        %v794 = vsub.f32 %v459, %v715
        %v795 = vmul.f32 %v794, %v792
        %v796 = vadd.f32 %v793, %v795
        %v797 = vlaneseq
        %v798 = vshrl.u32 %v797, 7
        %v799 = vsub.s32 0, %v798
        %v800 = vrot.slane %v792, %v799
        %v801 = vmul.f32 %v457, %v800
        %v802 = vmul.f32 %v458, %v800
        %v804 = vlaneseq
        %v805 = vshrl.u32 %v804, 7
        %v806 = vsub.s32 0, %v805
        %v807 = vrot.slane %v796, %v806
        %v809 = vadd.f32 %v801, %v807
        %v810 = vadd.f32 %v802, %v807
        %v811 = vmin.f32 %v809, 25.0
        %v812 = vmin.f32 %v810, 25.0
        %v813 = vmul.f32 %v811, 1.442695
        %v814 = vpow.pop %v813
        %v815 = vmul.f32 %v812, 1.442695
        %v816 = vpow.pop %v815
        %v817 = vadd.f32 %v814, 1.0
        %v818 = vadd.f32 %v816, 1.0
        %v819 = vmul.f32 %v817, %v817
        %v820 = vmul.f32 %v818, %v818
        %v821 = vsub.f32 %v819, 1.0
        %v822 = vsub.f32 %v820, 1.0
        %v823 = vadd.f32 %v819, 1.0
        %v824 = vadd.f32 %v820, 1.0
        %v825 = vrcp.pop %v823
        %v826 = vrcp.pop %v824
        %v827 = vmul.f32 %v821, %v825
        %v828 = vmul.f32 %v822, %v826
        %v829 = vmul.f32 %v809, %v827
        %v830 = vmul.f32 %v810, %v828
        %831 = vst.msk [vmem:[%s271] sm:$0xff] %vm460, %v829
        %832 = vst.msk [vmem:[%s271 + $0x8] sm:$0xff] %vm460, %v830
        %s833 = sand.u32 %s181, 1
        %s834 = scalar_lea.sflag [#allocation3], %s833
        %s835 = sand.u32 %s181, 1
        %s836 = smul.addr %s835, 16
        %s837 = scalar_lea.vmem [#allocation2], %s836
        // Predicated region
        $region49: #{tpu_custom_call.1} parent=47 // pred_check
          %p838 = pneg %p191
        $region50: #{tpu_custom_call.1} parent=47 // pred_check_branch
          %840 = sbr.rel (%p838) target = $region52
        $region51: #{tpu_custom_call.1} parent=47 // pred_region
          %s842 = ssub.s32 256, 256
          %843 = vsyncadd %s834, %s842
          %s844 = smul.addr %s21, 2
          %s845 = smul.addr %s844, 128
          %s846 = scalar_lea.hbm %s7, %s845
          %s847 = sshll.u32 %s837, 4
          %s848 = int_to_ptr.vmem [resolvable:$true] %s847
          %853 = dma.vmem_to_hbm [thread:$0]  %s848, 256, %s846, %s834, 128, 128, 8
        $region52: #{tpu_custom_call.1} parent=47 // pred_fallthru
          _
      $region48: #{tpu_custom_call.1} parent=5 // pred_fallthru
        _
      %p854 = scmp.le.s32.totalorder 2, %s16
      // Predicated region
      $region53: #{tpu_custom_call.1} parent=5 // pred_check
        %p855 = pneg %p854
      $region54: #{tpu_custom_call.1} parent=5 // pred_check_branch
        %857 = sbr.rel (%p855) target = $region56
      $region55: #{tpu_custom_call.1} parent=5 // pred_region
        %s858 = ssub.s32 %s16, 2
        // Predicated region
        $region57: #{tpu_custom_call.1} parent=55 // pred_check
          %p859 = pneg %p197
        $region58: #{tpu_custom_call.1} parent=55 // pred_check_branch
          %861 = sbr.rel (%p859) target = $region60
        $region59: #{tpu_custom_call.1} parent=55 // pred_region
          %s862 = sand.u32 %s182, 1
          %s863 = scalar_lea.sflag [#allocation3], %s862
          %s864 = sand.u32 %s182, 1
          %s865 = smul.addr %s864, 16
          %s866 = scalar_lea.vmem [#allocation2], %s865
          %867 = dma.done %s863, 256
        $region60: #{tpu_custom_call.1} parent=55 // pred_fallthru
          _
      $region56: #{tpu_custom_call.1} parent=5 // pred_fallthru
        _
    $region6: #{tpu_custom_call.1} parent=1 // loop_footer
      %s20 = sadd.s32 1, %s16
    $region7: #{tpu_custom_call.1} parent=1 // loop_footer_branch
      %15 = sbr.rel target = $region3
    $region8: #{tpu_custom_call.1} parent=1 // loop_exit
      _
    %868 = vsyncpa [#allocation3], 1
    %s869 = scalar_lea.sflag [#allocation3], 1
    %870 = vsyncpa %s869, 1

</llo_original>
